<compile_context>
chip_gen: v7x
topology: tpu7x:2x2x1
jax: 0.10.0
libtpu: 0.0.40
codegen_flags: <defaults>
</compile_context>

<pallas_src>
import math
import functools

import numpy as np
import jax
import jax.numpy as jnp
from jax.experimental import pallas as pl
from jax.experimental.pallas import tpu as pltpu

LANE = 128


def _pool_matmul_kernel(x_ref, p_ref, o_ref, acc_ref):
    """out[i-tile] = sum_k x[i-tile, k-tile] @ P[k-tile]; K is the last grid axis."""
    k = pl.program_id(1)

    @pl.when(k == 0)
    def _():
        acc_ref[...] = jnp.zeros_like(acc_ref)

    acc_ref[...] += jnp.dot(x_ref[...], p_ref[...],
                            preferred_element_type=jnp.float32)

    @pl.when(k == pl.num_programs(1) - 1)
    def _():
        o_ref[...] = acc_ref[...].astype(o_ref.dtype)


def _round_up(x, m):
    return ((x + m - 1) // m) * m


@functools.lru_cache(maxsize=None)
def _pooling_matrix(length, target_dim, padded_dim):
    """(L, Tp) adaptive-avg-pool matrix, zero-padded to lane-dense Tp."""
    p = np.zeros((length, padded_dim), dtype=np.float32)
    for t in range(target_dim):
        s = (t * length) // target_dim
        e = math.ceil((t + 1) * length / target_dim)
        p[s:e, t] = 1.0 / (e - s)
    return jnp.asarray(p)


def _pick_k_tile(length, max_tk=1024):
    """Largest multiple of 128 dividing `length` (<= max_tk); else full length."""
    tk = max_tk
    while tk >= LANE:
        if length % tk == 0:
            return tk
        tk -= LANE
    return length


def aggregator_forward(features, target_dim, *, max_row_tile=256):
    """JAX/Pallas equivalent of Aggregator(target_dim).forward(features)."""
    n = features.shape[0]
    x = jnp.reshape(features, (n, -1)).astype(jnp.float32)
    m, length = x.shape

    t_pad = _round_up(target_dim, LANE)                 # lane-dense output
    pool = _pooling_matrix(length, target_dim, t_pad)   # built once (static)

    # Row tiling: "parallel" axis. Partial last tile is fine (garbage rows
    # only produce garbage in rows that are never written back).
    tm = m if m <= max_row_tile else max_row_tile

    # Reduction tiling over L: only exact-dividing K tiles (a padded partial
    # K tile would pollute the accumulator). tk == length => pool matrix is
    # DMA'd once and stays resident across the whole grid.
    tk = _pick_k_tile(length) if length > 1024 else length

    grid = (pl.cdiv(m, tm), length // tk)

    out_padded = pl.pallas_call(
        _pool_matmul_kernel,
        out_shape=jax.ShapeDtypeStruct((m, t_pad), features.dtype),
        grid_spec=pltpu.PrefetchScalarGridSpec(
            num_scalar_prefetch=0,
            grid=grid,
            in_specs=[
                pl.BlockSpec((tm, tk), lambda i, k: (i, k)),      # x tile
                pl.BlockSpec((tk, t_pad), lambda i, k: (k, 0)),   # pool matrix
            ],
            out_specs=pl.BlockSpec((tm, t_pad), lambda i, k: (i, 0)),
            scratch_shapes=[pltpu.VMEM((tm, t_pad), jnp.float32)],
        ),
        compiler_params=pltpu.CompilerParams(
            dimension_semantics=("parallel", "arbitrary")),
    )(x, pool)

    # Drop the lane padding (layout plumbing in the wrapper, not the kernel).
    return out_padded[:, :target_dim]


def _reference_aggregator(features, target_dim):
    """Pure-numpy reference matching F.adaptive_avg_pool1d semantics."""
    n = features.shape[0]
    x = np.asarray(features, dtype=np.float32).reshape(n, -1)
    length = x.shape[1]
    out = np.zeros((n, target_dim), dtype=np.float32)
    for t in range(target_dim):
        s = (t * length) // target_dim
        e = math.ceil((t + 1) * length / target_dim)
        out[:, t] = x[:, s:e].mean(axis=1)
    return out


if __name__ == "__main__":
    key = jax.random.PRNGKey(0)
    k1, k2, k3 = jax.random.split(key, 3)

    # Case 1: divisible windows, lane-dense target_dim (L=1024 single K tile,
    # pooling matrix resident in VMEM).
    feats1 = jax.random.normal(k1, (16, 4, 16, 16), dtype=jnp.float32)
    y1 = jax.block_until_ready(aggregator_forward(feats1, 128))
    ref1 = _reference_aggregator(feats1, 128)
    assert y1.shape == (16, 128), y1.shape
    assert np.allclose(np.asarray(y1), ref1, atol=1e-5, rtol=1e-5), \
        "mismatch (divisible case)"

    # Case 2: ragged windows (L=147 not divisible by T=100) and non-128
    # target_dim -> exercises the zero-padded lane-dense output path.
    feats2 = jax.random.normal(k2, (8, 3, 7, 7), dtype=jnp.float32)
    y2 = jax.block_until_ready(aggregator_forward(feats2, 100))
    ref2 = _reference_aggregator(feats2, 100)
    assert y2.shape == (8, 100), y2.shape
    assert np.allclose(np.asarray(y2), ref2, atol=1e-5, rtol=1e-5), \
        "mismatch (ragged case)"

    # Case 3: large L triggering the K-reduction grid axis (L=4096 -> tk=1024,
    # 4 accumulation steps) plus a partial row tile (300 rows, tm=256).
    feats3 = jax.random.normal(k3, (300, 16, 16, 16), dtype=jnp.float32)
    y3 = jax.block_until_ready(aggregator_forward(feats3, 256))
    ref3 = _reference_aggregator(feats3, 256)
    assert y3.shape == (300, 256), y3.shape
    assert np.allclose(np.asarray(y3), ref3, atol=1e-4, rtol=1e-4), \
        "mismatch (K-tiled case)"

    print("KERNEL_OK")
</pallas_src>

<mosaic_0001>
module attributes {stable_mosaic.version = 11 : i64} {
  func.func @_pool_matmul_kernel(%arg0: i32, %arg1: i32, %arg2: memref<16x1024xf32, #tpu.memory_space<vmem>>, %arg3: memref<1024x128xf32, #tpu.memory_space<vmem>>, %arg4: memref<16x128xf32, #tpu.memory_space<vmem>>, %arg5: memref<16x128xf32, #tpu.memory_space<vmem>>) attributes {dimension_semantics = [#tpu.dimension_semantics<parallel>, #tpu.dimension_semantics<arbitrary>], iteration_bounds = array<i64: 1, 1>, scalar_prefetch = 0 : i64, scratch_operands = 1 : i64, tpu.core_type = #tpu.core_type<tc>, window_params = [{transform_indices = @transform_0, window_bounds = array<i64: 16, 1024>}, {transform_indices = @transform_1, window_bounds = array<i64: 1024, 128>}, {transform_indices = @transform_2, window_bounds = array<i64: 16, 128>}]} {
    %c0_i32 = arith.constant 0 : i32
    %0 = arith.cmpi eq, %arg1, %c0_i32 : i32
    %1 = arith.extui %0 : i1 to i32
    %c0_i32_0 = arith.constant 0 : i32
    %2 = arith.cmpi ne, %1, %c0_i32_0 : i32
    scf.if %2 {
      %cst_10 = arith.constant 0.000000e+00 : f32
      %12 = vector.broadcast %cst_10 : f32 to vector<16x128xf32>
      %c0_11 = arith.constant 0 : index
      %c0_12 = arith.constant 0 : index
      %13 = vector.load %arg5[%c0_11, %c0_12] : memref<16x128xf32, #tpu.memory_space<vmem>>, vector<16x128xf32>
      tpu.vector_store %arg5[%c0_11, %c0_12], %12 {strides = array<i32>} : memref<16x128xf32, #tpu.memory_space<vmem>>, vector<16x128xf32>,
    } else {
    }
    %c0 = arith.constant 0 : index
    %c0_1 = arith.constant 0 : index
    %3 = vector.load %arg5[%c0, %c0_1] : memref<16x128xf32, #tpu.memory_space<vmem>>, vector<16x128xf32>
    %c0_2 = arith.constant 0 : index
    %c0_3 = arith.constant 0 : index
    %4 = vector.load %arg2[%c0_2, %c0_3] : memref<16x1024xf32, #tpu.memory_space<vmem>>, vector<16x1024xf32>
    %c0_4 = arith.constant 0 : index
    %c0_5 = arith.constant 0 : index
    %5 = vector.load %arg3[%c0_4, %c0_5] : memref<1024x128xf32, #tpu.memory_space<vmem>>, vector<1024x128xf32>
    %cst = arith.constant dense<0.000000e+00> : vector<16x128xf32>
    %6 = tpu.matmul %4, %5, %cst {dimension_numbers = #tpu.dot_dimension_numbers<[1], [0], [0], [1], [0, 0, 1, 1], [], []>} : vector<16x1024xf32>, vector<1024x128xf32>, vector<16x128xf32> -> vector<16x128xf32>
    %7 = arith.addf %3, %6 : vector<16x128xf32>
    %c0_6 = arith.constant 0 : index
    %c0_7 = arith.constant 0 : index
    %8 = vector.load %arg5[%c0_6, %c0_7] : memref<16x128xf32, #tpu.memory_space<vmem>>, vector<16x128xf32>
    tpu.vector_store %arg5[%c0_6, %c0_7], %7 {strides = array<i32>} : memref<16x128xf32, #tpu.memory_space<vmem>>, vector<16x128xf32>,
    %c0_i32_8 = arith.constant 0 : i32
    %9 = arith.cmpi eq, %arg1, %c0_i32_8 : i32
    %10 = arith.extui %9 : i1 to i32
    %c0_i32_9 = arith.constant 0 : i32
    %11 = arith.cmpi ne, %10, %c0_i32_9 : i32
    scf.if %11 {
      %c0_10 = arith.constant 0 : index
      %c0_11 = arith.constant 0 : index
      %12 = vector.load %arg5[%c0_10, %c0_11] : memref<16x128xf32, #tpu.memory_space<vmem>>, vector<16x128xf32>
      %c0_12 = arith.constant 0 : index
      %c0_13 = arith.constant 0 : index
      %13 = vector.load %arg4[%c0_12, %c0_13] : memref<16x128xf32, #tpu.memory_space<vmem>>, vector<16x128xf32>
      tpu.vector_store %arg4[%c0_12, %c0_13], %12 {strides = array<i32>} : memref<16x128xf32, #tpu.memory_space<vmem>>, vector<16x128xf32>,
    } else {
    }
    return
  }
  func.func @transform_0(%arg0: i32, %arg1: i32) -> (i32, i32) {
    %c0_i32 = arith.constant 0 : i32
    return %arg0, %arg1 : i32, i32
  }
  func.func @transform_1(%arg0: i32, %arg1: i32) -> (i32, i32) {
    %c0_i32 = arith.constant 0 : i32
    %c0_i32_0 = arith.constant 0 : i32
    return %arg1, %c0_i32 : i32, i32
  }
  func.func @transform_2(%arg0: i32, %arg1: i32) -> (i32, i32) {
    %c0_i32 = arith.constant 0 : i32
    %c0_i32_0 = arith.constant 0 : i32
    return %arg0, %c0_i32 : i32, i32
  }
}

</mosaic_0001>

<llo_original>
// kernel: tpu_custom_call.1
$region0: #{tpu_custom_call.1}
  #allocation0 [shape = 'u32[]', space=smem, size = 0x4, offset = 0x4, fixed_abs, tag = 'smem constant byte address 0x4 - core index']
  #allocation1 [shape = 'u32[144,128]{1,0:T(1,128)}', space=vmem, size = 0x12000, scoped, tag = 'internal scratch']
  #allocation2 [shape = 'f32[16,128]{1,0:T(8,128)}', space=vmem, size = 0x2000, scoped, tag = 'scratch operand']
  %s0 = inlined_call_operand.hbm [shape: f32[16,1024], index: 0, kind: input, shape index: {}]
  %s1 = inlined_call_operand.hbm [shape: f32[1024,128], index: 1, kind: input, shape index: {}]
  %s2 = inlined_call_operand.hbm [shape: f32[16,128], index: 2, kind: output, shape index: {}]
  %s3 = sld [smem:[#allocation0]]
  $region34: #{tpu_custom_call.1} parent=0
    _
  %s5 = ssub.s32 1, %s3
  %s6 = scalar_select 0, %s5, %s3
  $region1: #{tpu_custom_call.1} parent=0
    #allocation3 [shape = 'u8[65536]{0}', space=vmem, size = 0x10000, scoped, tag = 'input window, operand 0, single buffered']
    #allocation4 [shape = 's32[1]{0}', space=sflag, size = 0x4, scoped, tag = 'scoped memory for tpu_custom_call.1']
    #allocation5 [shape = 's32[1]{0}', space=sflag, size = 0x4, scoped, tag = 'scoped memory for tpu_custom_call.1']
    #allocation6 [shape = 'u8[524288]{0}', space=vmem, size = 0x80000, scoped, tag = 'input window, operand 1, single buffered']
    #allocation7 [shape = 's32[1]{0}', space=sflag, size = 0x4, scoped, tag = 'scoped memory for tpu_custom_call.1']
    #allocation8 [shape = 'u8[8192]{0}', space=vmem, size = 0x2000, scoped, tag = 'output window, operand 0, single buffered']
    %7 = vsyncpa [#allocation4], 0
    %8 = vsyncpa [#allocation7], 0
    %9 = vsyncpa [#allocation5], 0
    // Predicated region
    $region2: #{tpu_custom_call.1} parent=1 // pred_check
      _
    $region3: #{tpu_custom_call.1} parent=1 // pred_check_branch
      %11 = sbr.rel (0) target = $region5
    $region4: #{tpu_custom_call.1} parent=1 // pred_region
      %s13 = ssub.s32 2048, 2048
      %14 = vsyncadd [#allocation4], %s13
      %s15 = sshll.u32 [#allocation3], 4
      %s16 = int_to_ptr.vmem [resolvable:$true] %s15
      %21 = dma.hbm_to_vmem [thread:$0]  %s0, 2048, %s16, [#allocation4], 1024, 1024, 64
    $region5: #{tpu_custom_call.1} parent=1 // pred_fallthru
      _
    // Predicated region
    $region6: #{tpu_custom_call.1} parent=1 // pred_check
      _
    $region7: #{tpu_custom_call.1} parent=1 // pred_check_branch
      %23 = sbr.rel (0) target = $region9
    $region8: #{tpu_custom_call.1} parent=1 // pred_region
      %s25 = ssub.s32 16384, 16384
      %26 = vsyncadd [#allocation7], %s25
      %s27 = sshll.u32 [#allocation6], 4
      %s28 = int_to_ptr.vmem [resolvable:$true] %s27
      %33 = dma.hbm_to_vmem [thread:$0]  %s1, 16384, %s28, [#allocation7], 128, 128, 8
    $region9: #{tpu_custom_call.1} parent=1 // pred_fallthru
      _
    // Predicated region
    $region10: #{tpu_custom_call.1} parent=1 // pred_check
      _
    $region11: #{tpu_custom_call.1} parent=1 // pred_check_branch
      %35 = sbr.rel (0) target = $region13
    $region12: #{tpu_custom_call.1} parent=1 // pred_region
      %36 = dma.done [#allocation4], 2048
    $region13: #{tpu_custom_call.1} parent=1 // pred_fallthru
      _
    // Predicated region
    $region14: #{tpu_custom_call.1} parent=1 // pred_check
      _
    $region15: #{tpu_custom_call.1} parent=1 // pred_check_branch
      %38 = sbr.rel (0) target = $region17
    $region16: #{tpu_custom_call.1} parent=1 // pred_region
      %39 = dma.done [#allocation7], 16384
    $region17: #{tpu_custom_call.1} parent=1 // pred_fallthru
      _
    %p40 = scmp.eq.s32.totalorder 0, 0
    // Predicated region
    $region18: #{tpu_custom_call.1} parent=1 // pred_check
      %p41 = pneg %p40
    $region19: #{tpu_custom_call.1} parent=1 // pred_check_branch
      %43 = sbr.rel (%p41) target = $region21
    $region20: #{tpu_custom_call.1} parent=1 // pred_region
      %44 = vst [vmem:[#allocation2] sm:$0xff] 0.0
      %45 = vst [vmem:[#allocation2 + $0x8] sm:$0xff] 0.0
    $region21: #{tpu_custom_call.1} parent=1 // pred_fallthru
      _
    %v46 = vld [vmem:[#allocation2] sm:$0xff]
    %v47 = vld [vmem:[#allocation2 + $0x8] sm:$0xff]
    %v48 = vld [vmem:[#allocation3] sm:$0xff]
    %v49 = vld [vmem:[#allocation3 + $0x8] sm:$0xff]
    %v50 = vld [vmem:[#allocation3 + $0x10] sm:$0xff]
    %v51 = vld [vmem:[#allocation3 + $0x18] sm:$0xff]
    %v52 = vld [vmem:[#allocation3 + $0x20] sm:$0xff]
    %v53 = vld [vmem:[#allocation3 + $0x28] sm:$0xff]
    %v54 = vld [vmem:[#allocation3 + $0x30] sm:$0xff]
    %v55 = vld [vmem:[#allocation3 + $0x38] sm:$0xff]
    %v56 = vld [vmem:[#allocation3 + $0x40] sm:$0xff]
    %v57 = vld [vmem:[#allocation3 + $0x48] sm:$0xff]
    %v58 = vld [vmem:[#allocation3 + $0x50] sm:$0xff]
    %v59 = vld [vmem:[#allocation3 + $0x58] sm:$0xff]
    %v60 = vld [vmem:[#allocation3 + $0x60] sm:$0xff]
    %v61 = vld [vmem:[#allocation3 + $0x68] sm:$0xff]
    %v62 = vld [vmem:[#allocation3 + $0x70] sm:$0xff]
    %v63 = vld [vmem:[#allocation3 + $0x78] sm:$0xff]
    %v64 = vld [vmem:[#allocation6] sm:$0xff]
    %v65 = vld [vmem:[#allocation6 + $0x8] sm:$0xff]
    %v66 = vld [vmem:[#allocation6 + $0x10] sm:$0xff]
    %v67 = vld [vmem:[#allocation6 + $0x18] sm:$0xff]
    %v68 = vld [vmem:[#allocation6 + $0x20] sm:$0xff]
    %v69 = vld [vmem:[#allocation6 + $0x28] sm:$0xff]
    %v70 = vld [vmem:[#allocation6 + $0x30] sm:$0xff]
    %v71 = vld [vmem:[#allocation6 + $0x38] sm:$0xff]
    %v72 = vld [vmem:[#allocation6 + $0x40] sm:$0xff]
    %v73 = vld [vmem:[#allocation6 + $0x48] sm:$0xff]
    %v74 = vld [vmem:[#allocation6 + $0x50] sm:$0xff]
    %v75 = vld [vmem:[#allocation6 + $0x58] sm:$0xff]
    %v76 = vld [vmem:[#allocation6 + $0x60] sm:$0xff]
    %v77 = vld [vmem:[#allocation6 + $0x68] sm:$0xff]
    %v78 = vld [vmem:[#allocation6 + $0x70] sm:$0xff]
    %v79 = vld [vmem:[#allocation6 + $0x78] sm:$0xff]
    %v80 = vld [vmem:[#allocation6 + $0x80] sm:$0xff]
    %v81 = vld [vmem:[#allocation6 + $0x88] sm:$0xff]
    %v82 = vld [vmem:[#allocation6 + $0x90] sm:$0xff]
    %v83 = vld [vmem:[#allocation6 + $0x98] sm:$0xff]
    %v84 = vld [vmem:[#allocation6 + $0xa0] sm:$0xff]
    %v85 = vld [vmem:[#allocation6 + $0xa8] sm:$0xff]
    %v86 = vld [vmem:[#allocation6 + $0xb0] sm:$0xff]
    %v87 = vld [vmem:[#allocation6 + $0xb8] sm:$0xff]
    %v88 = vld [vmem:[#allocation6 + $0xc0] sm:$0xff]
    %v89 = vld [vmem:[#allocation6 + $0xc8] sm:$0xff]
    %v90 = vld [vmem:[#allocation6 + $0xd0] sm:$0xff]
    %v91 = vld [vmem:[#allocation6 + $0xd8] sm:$0xff]
    %v92 = vld [vmem:[#allocation6 + $0xe0] sm:$0xff]
    %v93 = vld [vmem:[#allocation6 + $0xe8] sm:$0xff]
    %v94 = vld [vmem:[#allocation6 + $0xf0] sm:$0xff]
    %v95 = vld [vmem:[#allocation6 + $0xf8] sm:$0xff]
    %v96 = vld [vmem:[#allocation6 + $0x100] sm:$0xff]
    %v97 = vld [vmem:[#allocation6 + $0x108] sm:$0xff]
    %v98 = vld [vmem:[#allocation6 + $0x110] sm:$0xff]
    %v99 = vld [vmem:[#allocation6 + $0x118] sm:$0xff]
    %v100 = vld [vmem:[#allocation6 + $0x120] sm:$0xff]
    %v101 = vld [vmem:[#allocation6 + $0x128] sm:$0xff]
    %v102 = vld [vmem:[#allocation6 + $0x130] sm:$0xff]
    %v103 = vld [vmem:[#allocation6 + $0x138] sm:$0xff]
    %v104 = vld [vmem:[#allocation6 + $0x140] sm:$0xff]
    %v105 = vld [vmem:[#allocation6 + $0x148] sm:$0xff]
    %v106 = vld [vmem:[#allocation6 + $0x150] sm:$0xff]
    %v107 = vld [vmem:[#allocation6 + $0x158] sm:$0xff]
    %v108 = vld [vmem:[#allocation6 + $0x160] sm:$0xff]
    %v109 = vld [vmem:[#allocation6 + $0x168] sm:$0xff]
    %v110 = vld [vmem:[#allocation6 + $0x170] sm:$0xff]
    %v111 = vld [vmem:[#allocation6 + $0x178] sm:$0xff]
    %v112 = vld [vmem:[#allocation6 + $0x180] sm:$0xff]
    %v113 = vld [vmem:[#allocation6 + $0x188] sm:$0xff]
    %v114 = vld [vmem:[#allocation6 + $0x190] sm:$0xff]
    %v115 = vld [vmem:[#allocation6 + $0x198] sm:$0xff]
    %v116 = vld [vmem:[#allocation6 + $0x1a0] sm:$0xff]
    %v117 = vld [vmem:[#allocation6 + $0x1a8] sm:$0xff]
    %v118 = vld [vmem:[#allocation6 + $0x1b0] sm:$0xff]
    %v119 = vld [vmem:[#allocation6 + $0x1b8] sm:$0xff]
    %v120 = vld [vmem:[#allocation6 + $0x1c0] sm:$0xff]
    %v121 = vld [vmem:[#allocation6 + $0x1c8] sm:$0xff]
    %v122 = vld [vmem:[#allocation6 + $0x1d0] sm:$0xff]
    %v123 = vld [vmem:[#allocation6 + $0x1d8] sm:$0xff]
    %v124 = vld [vmem:[#allocation6 + $0x1e0] sm:$0xff]
    %v125 = vld [vmem:[#allocation6 + $0x1e8] sm:$0xff]
    %v126 = vld [vmem:[#allocation6 + $0x1f0] sm:$0xff]
    %v127 = vld [vmem:[#allocation6 + $0x1f8] sm:$0xff]
    %v128 = vld [vmem:[#allocation6 + $0x200] sm:$0xff]
    %v129 = vld [vmem:[#allocation6 + $0x208] sm:$0xff]
    %v130 = vld [vmem:[#allocation6 + $0x210] sm:$0xff]
    %v131 = vld [vmem:[#allocation6 + $0x218] sm:$0xff]
    %v132 = vld [vmem:[#allocation6 + $0x220] sm:$0xff]
    %v133 = vld [vmem:[#allocation6 + $0x228] sm:$0xff]
    %v134 = vld [vmem:[#allocation6 + $0x230] sm:$0xff]
    %v135 = vld [vmem:[#allocation6 + $0x238] sm:$0xff]
    %v136 = vld [vmem:[#allocation6 + $0x240] sm:$0xff]
    %v137 = vld [vmem:[#allocation6 + $0x248] sm:$0xff]
    %v138 = vld [vmem:[#allocation6 + $0x250] sm:$0xff]
    %v139 = vld [vmem:[#allocation6 + $0x258] sm:$0xff]
    %v140 = vld [vmem:[#allocation6 + $0x260] sm:$0xff]
    %v141 = vld [vmem:[#allocation6 + $0x268] sm:$0xff]
    %v142 = vld [vmem:[#allocation6 + $0x270] sm:$0xff]
    %v143 = vld [vmem:[#allocation6 + $0x278] sm:$0xff]
    %v144 = vld [vmem:[#allocation6 + $0x280] sm:$0xff]
    %v145 = vld [vmem:[#allocation6 + $0x288] sm:$0xff]
    %v146 = vld [vmem:[#allocation6 + $0x290] sm:$0xff]
    %v147 = vld [vmem:[#allocation6 + $0x298] sm:$0xff]
    %v148 = vld [vmem:[#allocation6 + $0x2a0] sm:$0xff]
    %v149 = vld [vmem:[#allocation6 + $0x2a8] sm:$0xff]
    %v150 = vld [vmem:[#allocation6 + $0x2b0] sm:$0xff]
    %v151 = vld [vmem:[#allocation6 + $0x2b8] sm:$0xff]
    %v152 = vld [vmem:[#allocation6 + $0x2c0] sm:$0xff]
    %v153 = vld [vmem:[#allocation6 + $0x2c8] sm:$0xff]
    %v154 = vld [vmem:[#allocation6 + $0x2d0] sm:$0xff]
    %v155 = vld [vmem:[#allocation6 + $0x2d8] sm:$0xff]
    %v156 = vld [vmem:[#allocation6 + $0x2e0] sm:$0xff]
    %v157 = vld [vmem:[#allocation6 + $0x2e8] sm:$0xff]
    %v158 = vld [vmem:[#allocation6 + $0x2f0] sm:$0xff]
    %v159 = vld [vmem:[#allocation6 + $0x2f8] sm:$0xff]
    %v160 = vld [vmem:[#allocation6 + $0x300] sm:$0xff]
    %v161 = vld [vmem:[#allocation6 + $0x308] sm:$0xff]
    %v162 = vld [vmem:[#allocation6 + $0x310] sm:$0xff]
    %v163 = vld [vmem:[#allocation6 + $0x318] sm:$0xff]
    %v164 = vld [vmem:[#allocation6 + $0x320] sm:$0xff]
    %v165 = vld [vmem:[#allocation6 + $0x328] sm:$0xff]
    %v166 = vld [vmem:[#allocation6 + $0x330] sm:$0xff]
    %v167 = vld [vmem:[#allocation6 + $0x338] sm:$0xff]
    %v168 = vld [vmem:[#allocation6 + $0x340] sm:$0xff]
    %v169 = vld [vmem:[#allocation6 + $0x348] sm:$0xff]
    %v170 = vld [vmem:[#allocation6 + $0x350] sm:$0xff]
    %v171 = vld [vmem:[#allocation6 + $0x358] sm:$0xff]
    %v172 = vld [vmem:[#allocation6 + $0x360] sm:$0xff]
    %v173 = vld [vmem:[#allocation6 + $0x368] sm:$0xff]
    %v174 = vld [vmem:[#allocation6 + $0x370] sm:$0xff]
    %v175 = vld [vmem:[#allocation6 + $0x378] sm:$0xff]
    %v176 = vld [vmem:[#allocation6 + $0x380] sm:$0xff]
    %v177 = vld [vmem:[#allocation6 + $0x388] sm:$0xff]
    %v178 = vld [vmem:[#allocation6 + $0x390] sm:$0xff]
    %v179 = vld [vmem:[#allocation6 + $0x398] sm:$0xff]
    %v180 = vld [vmem:[#allocation6 + $0x3a0] sm:$0xff]
    %v181 = vld [vmem:[#allocation6 + $0x3a8] sm:$0xff]
    %v182 = vld [vmem:[#allocation6 + $0x3b0] sm:$0xff]
    %v183 = vld [vmem:[#allocation6 + $0x3b8] sm:$0xff]
    %v184 = vld [vmem:[#allocation6 + $0x3c0] sm:$0xff]
    %v185 = vld [vmem:[#allocation6 + $0x3c8] sm:$0xff]
    %v186 = vld [vmem:[#allocation6 + $0x3d0] sm:$0xff]
    %v187 = vld [vmem:[#allocation6 + $0x3d8] sm:$0xff]
    %v188 = vld [vmem:[#allocation6 + $0x3e0] sm:$0xff]
    %v189 = vld [vmem:[#allocation6 + $0x3e8] sm:$0xff]
    %v190 = vld [vmem:[#allocation6 + $0x3f0] sm:$0xff]
    %v191 = vld [vmem:[#allocation6 + $0x3f8] sm:$0xff]
    %192 = vmatprep.subr.mxu0 0.0
    %193 = vmatpush1.msra.mxu0 %v64
    %194 = vmatprep.subr.mxu0 0.0
    %195 = vmatpush1.msra.mxu0 %v65
    %196 = vmatprep.subr.mxu0 0.0
    %197 = vmatpush1.msra.mxu0 %v66
    %198 = vmatprep.subr.mxu0 0.0
    %199 = vmatpush1.msra.mxu0 %v67
    %200 = vmatprep.subr.mxu0 0.0
    %201 = vmatpush1.msra.mxu0 %v68
    %202 = vmatprep.subr.mxu0 0.0
    %203 = vmatpush1.msra.mxu0 %v69
    %204 = vmatprep.subr.mxu0 0.0
    %205 = vmatpush1.msra.mxu0 %v70
    %206 = vmatprep.subr.mxu0 0.0
    %207 = vmatpush1.msra.mxu0 %v71
    %208 = vmatprep.subr.mxu0 0.0
    %209 = vmatpush1.msra.mxu0 %v72
    %210 = vmatprep.subr.mxu0 0.0
    %211 = vmatpush1.msra.mxu0 %v73
    %212 = vmatprep.subr.mxu0 0.0
    %213 = vmatpush1.msra.mxu0 %v74
    %214 = vmatprep.subr.mxu0 0.0
    %215 = vmatpush1.msra.mxu0 %v75
    %216 = vmatprep.subr.mxu0 0.0
    %217 = vmatpush1.msra.mxu0 %v76
    %218 = vmatprep.subr.mxu0 0.0
    %219 = vmatpush1.msra.mxu0 %v77
    %220 = vmatprep.subr.mxu0 0.0
    %221 = vmatpush1.msra.mxu0 %v78
    %222 = vmatprep.subr.mxu0 0.0
    %223 = vmatpush1.msra.mxu0 %v79
    %224 = vmatprep.subr.mxu0 0.0
    %225 = vmatpush1.msra.mxu0 %v80
    %226 = vmatprep.subr.mxu0 0.0
    %227 = vmatpush1.msra.mxu0 %v81
    %228 = vmatprep.subr.mxu0 0.0
    %229 = vmatpush1.msra.mxu0 %v82
    %230 = vmatprep.subr.mxu0 0.0
    %231 = vmatpush1.msra.mxu0 %v83
    %232 = vmatprep.subr.mxu0 0.0
    %233 = vmatpush1.msra.mxu0 %v84
    %234 = vmatprep.subr.mxu0 0.0
    %235 = vmatpush1.msra.mxu0 %v85
    %236 = vmatprep.subr.mxu0 0.0
    %237 = vmatpush1.msra.mxu0 %v86
    %238 = vmatprep.subr.mxu0 0.0
    %239 = vmatpush1.msra.mxu0 %v87
    %240 = vmatprep.subr.mxu0 0.0
    %241 = vmatpush1.msra.mxu0 %v88
    %242 = vmatprep.subr.mxu0 0.0
    %243 = vmatpush1.msra.mxu0 %v89
    %244 = vmatprep.subr.mxu0 0.0
    %245 = vmatpush1.msra.mxu0 %v90
    %246 = vmatprep.subr.mxu0 0.0
    %247 = vmatpush1.msra.mxu0 %v91
    %248 = vmatprep.subr.mxu0 0.0
    %249 = vmatpush1.msra.mxu0 %v92
    %250 = vmatprep.subr.mxu0 0.0
    %251 = vmatpush1.msra.mxu0 %v93
    %252 = vmatprep.subr.mxu0 0.0
    %253 = vmatpush1.msra.mxu0 %v94
    %254 = vmatprep.subr.mxu0 0.0
    %255 = vmatpush1.msra.mxu0 %v95
    %256 = vmatprep.mubr.f32.mxu0 %v49
    %257 = vmatmul.mubr.f32.gmra.mrb[0].mxu0 %v48
    %v258 = vpop.f32.mrb[0].mxu0
    %v259 = vadd.f32 0.0, %v258
    %v260 = vpop.f32.mrb[0].mxu0
    %261 = vmatprep.mubr.f32.mxu0 %v57
    %262 = vmatmul.mubr.f32.gmra.mrb[0].mxu0 %v56
    %v263 = vpop.f32.mrb[0].mxu0
    %v264 = vadd.f32 0.0, %v263
    %v265 = vpop.f32.mrb[0].mxu0
    %266 = vdwg.mxu0
    %267 = vmatprep.subr.mxu0 0.0
    %268 = vmatpush1.msra.mxu0 %v96
    %269 = vmatprep.subr.mxu0 0.0
    %270 = vmatpush1.msra.mxu0 %v97
    %271 = vmatprep.subr.mxu0 0.0
    %272 = vmatpush1.msra.mxu0 %v98
    %273 = vmatprep.subr.mxu0 0.0
    %274 = vmatpush1.msra.mxu0 %v99
    %275 = vmatprep.subr.mxu0 0.0
    %276 = vmatpush1.msra.mxu0 %v100
    %277 = vmatprep.subr.mxu0 0.0
    %278 = vmatpush1.msra.mxu0 %v101
    %279 = vmatprep.subr.mxu0 0.0
    %280 = vmatpush1.msra.mxu0 %v102
    %281 = vmatprep.subr.mxu0 0.0
    %282 = vmatpush1.msra.mxu0 %v103
    %283 = vmatprep.subr.mxu0 0.0
    %284 = vmatpush1.msra.mxu0 %v104
    %285 = vmatprep.subr.mxu0 0.0
    %286 = vmatpush1.msra.mxu0 %v105
    %287 = vmatprep.subr.mxu0 0.0
    %288 = vmatpush1.msra.mxu0 %v106
    %289 = vmatprep.subr.mxu0 0.0
    %290 = vmatpush1.msra.mxu0 %v107
    %291 = vmatprep.subr.mxu0 0.0
    %292 = vmatpush1.msra.mxu0 %v108
    %293 = vmatprep.subr.mxu0 0.0
    %294 = vmatpush1.msra.mxu0 %v109
    %295 = vmatprep.subr.mxu0 0.0
    %296 = vmatpush1.msra.mxu0 %v110
    %297 = vmatprep.subr.mxu0 0.0
    %298 = vmatpush1.msra.mxu0 %v111
    %299 = vmatprep.subr.mxu0 0.0
    %300 = vmatpush1.msra.mxu0 %v112
    %301 = vmatprep.subr.mxu0 0.0
    %302 = vmatpush1.msra.mxu0 %v113
    %303 = vmatprep.subr.mxu0 0.0
    %304 = vmatpush1.msra.mxu0 %v114
    %305 = vmatprep.subr.mxu0 0.0
    %306 = vmatpush1.msra.mxu0 %v115
    %307 = vmatprep.subr.mxu0 0.0
    %308 = vmatpush1.msra.mxu0 %v116
    %309 = vmatprep.subr.mxu0 0.0
    %310 = vmatpush1.msra.mxu0 %v117
    %311 = vmatprep.subr.mxu0 0.0
    %312 = vmatpush1.msra.mxu0 %v118
    %313 = vmatprep.subr.mxu0 0.0
    %314 = vmatpush1.msra.mxu0 %v119
    %315 = vmatprep.subr.mxu0 0.0
    %316 = vmatpush1.msra.mxu0 %v120
    %317 = vmatprep.subr.mxu0 0.0
    %318 = vmatpush1.msra.mxu0 %v121
    %319 = vmatprep.subr.mxu0 0.0
    %320 = vmatpush1.msra.mxu0 %v122
    %321 = vmatprep.subr.mxu0 0.0
    %322 = vmatpush1.msra.mxu0 %v123
    %323 = vmatprep.subr.mxu0 0.0
    %324 = vmatpush1.msra.mxu0 %v124
    %325 = vmatprep.subr.mxu0 0.0
    %326 = vmatpush1.msra.mxu0 %v125
    %327 = vmatprep.subr.mxu0 0.0
    %328 = vmatpush1.msra.mxu0 %v126
    %329 = vmatprep.subr.mxu0 0.0
    %330 = vmatpush1.msra.mxu0 %v127
    %331 = vmatprep.mubr.f32.mxu0 %v51
    %332 = vmatmul.mubr.f32.gmra.mrb[0].mxu0 %v50
    %v333 = vpop.f32.mrb[0].mxu0
    %v334 = vadd.f32 %v259, %v333
    %v335 = vpop.f32.mrb[0].mxu0
    %336 = vmatprep.mubr.f32.mxu0 %v59
    %337 = vmatmul.mubr.f32.gmra.mrb[0].mxu0 %v58
    %v338 = vpop.f32.mrb[0].mxu0
    %v339 = vadd.f32 %v264, %v338
    %v340 = vpop.f32.mrb[0].mxu0
    %341 = vdwg.mxu0
    %342 = vmatprep.subr.mxu0 0.0
    %343 = vmatpush1.msra.mxu0 %v128
    %344 = vmatprep.subr.mxu0 0.0
    %345 = vmatpush1.msra.mxu0 %v129
    %346 = vmatprep.subr.mxu0 0.0
    %347 = vmatpush1.msra.mxu0 %v130
    %348 = vmatprep.subr.mxu0 0.0
    %349 = vmatpush1.msra.mxu0 %v131
    %350 = vmatprep.subr.mxu0 0.0
    %351 = vmatpush1.msra.mxu0 %v132
    %352 = vmatprep.subr.mxu0 0.0
    %353 = vmatpush1.msra.mxu0 %v133
    %354 = vmatprep.subr.mxu0 0.0
    %355 = vmatpush1.msra.mxu0 %v134
    %356 = vmatprep.subr.mxu0 0.0
    %357 = vmatpush1.msra.mxu0 %v135
    %358 = vmatprep.subr.mxu0 0.0
    %359 = vmatpush1.msra.mxu0 %v136
    %360 = vmatprep.subr.mxu0 0.0
    %361 = vmatpush1.msra.mxu0 %v137
    %362 = vmatprep.subr.mxu0 0.0
    %363 = vmatpush1.msra.mxu0 %v138
    %364 = vmatprep.subr.mxu0 0.0
    %365 = vmatpush1.msra.mxu0 %v139
    %366 = vmatprep.subr.mxu0 0.0
    %367 = vmatpush1.msra.mxu0 %v140
    %368 = vmatprep.subr.mxu0 0.0
    %369 = vmatpush1.msra.mxu0 %v141
    %370 = vmatprep.subr.mxu0 0.0
    %371 = vmatpush1.msra.mxu0 %v142
    %372 = vmatprep.subr.mxu0 0.0
    %373 = vmatpush1.msra.mxu0 %v143
    %374 = vmatprep.subr.mxu0 0.0
    %375 = vmatpush1.msra.mxu0 %v144
    %376 = vmatprep.subr.mxu0 0.0
    %377 = vmatpush1.msra.mxu0 %v145
    %378 = vmatprep.subr.mxu0 0.0
    %379 = vmatpush1.msra.mxu0 %v146
    %380 = vmatprep.subr.mxu0 0.0
    %381 = vmatpush1.msra.mxu0 %v147
    %382 = vmatprep.subr.mxu0 0.0
    %383 = vmatpush1.msra.mxu0 %v148
    %384 = vmatprep.subr.mxu0 0.0
    %385 = vmatpush1.msra.mxu0 %v149
    %386 = vmatprep.subr.mxu0 0.0
    %387 = vmatpush1.msra.mxu0 %v150
    %388 = vmatprep.subr.mxu0 0.0
    %389 = vmatpush1.msra.mxu0 %v151
    %390 = vmatprep.subr.mxu0 0.0
    %391 = vmatpush1.msra.mxu0 %v152
    %392 = vmatprep.subr.mxu0 0.0
    %393 = vmatpush1.msra.mxu0 %v153
    %394 = vmatprep.subr.mxu0 0.0
    %395 = vmatpush1.msra.mxu0 %v154
    %396 = vmatprep.subr.mxu0 0.0
    %397 = vmatpush1.msra.mxu0 %v155
    %398 = vmatprep.subr.mxu0 0.0
    %399 = vmatpush1.msra.mxu0 %v156
    %400 = vmatprep.subr.mxu0 0.0
    %401 = vmatpush1.msra.mxu0 %v157
    %402 = vmatprep.subr.mxu0 0.0
    %403 = vmatpush1.msra.mxu0 %v158
    %404 = vmatprep.subr.mxu0 0.0
    %405 = vmatpush1.msra.mxu0 %v159
    %406 = vmatprep.mubr.f32.mxu0 %v53
    %407 = vmatmul.mubr.f32.gmra.mrb[0].mxu0 %v52
    %v408 = vpop.f32.mrb[0].mxu0
    %v409 = vadd.f32 %v334, %v408
    %v410 = vpop.f32.mrb[0].mxu0
    %411 = vmatprep.mubr.f32.mxu0 %v61
    %412 = vmatmul.mubr.f32.gmra.mrb[0].mxu0 %v60
    %v413 = vpop.f32.mrb[0].mxu0
    %v414 = vadd.f32 %v339, %v413
    %v415 = vpop.f32.mrb[0].mxu0
    %416 = vdwg.mxu0
    %417 = vmatprep.subr.mxu0 0.0
    %418 = vmatpush1.msra.mxu0 %v160
    %419 = vmatprep.subr.mxu0 0.0
    %420 = vmatpush1.msra.mxu0 %v161
    %421 = vmatprep.subr.mxu0 0.0
    %422 = vmatpush1.msra.mxu0 %v162
    %423 = vmatprep.subr.mxu0 0.0
    %424 = vmatpush1.msra.mxu0 %v163
    %425 = vmatprep.subr.mxu0 0.0
    %426 = vmatpush1.msra.mxu0 %v164
    %427 = vmatprep.subr.mxu0 0.0
    %428 = vmatpush1.msra.mxu0 %v165
    %429 = vmatprep.subr.mxu0 0.0
    %430 = vmatpush1.msra.mxu0 %v166
    %431 = vmatprep.subr.mxu0 0.0
    %432 = vmatpush1.msra.mxu0 %v167
    %433 = vmatprep.subr.mxu0 0.0
    %434 = vmatpush1.msra.mxu0 %v168
    %435 = vmatprep.subr.mxu0 0.0
    %436 = vmatpush1.msra.mxu0 %v169
    %437 = vmatprep.subr.mxu0 0.0
    %438 = vmatpush1.msra.mxu0 %v170
    %439 = vmatprep.subr.mxu0 0.0
    %440 = vmatpush1.msra.mxu0 %v171
    %441 = vmatprep.subr.mxu0 0.0
    %442 = vmatpush1.msra.mxu0 %v172
    %443 = vmatprep.subr.mxu0 0.0
    %444 = vmatpush1.msra.mxu0 %v173
    %445 = vmatprep.subr.mxu0 0.0
    %446 = vmatpush1.msra.mxu0 %v174
    %447 = vmatprep.subr.mxu0 0.0
    %448 = vmatpush1.msra.mxu0 %v175
    %449 = vmatprep.subr.mxu0 0.0
    %450 = vmatpush1.msra.mxu0 %v176
    %451 = vmatprep.subr.mxu0 0.0
    %452 = vmatpush1.msra.mxu0 %v177
    %453 = vmatprep.subr.mxu0 0.0
    %454 = vmatpush1.msra.mxu0 %v178
    %455 = vmatprep.subr.mxu0 0.0
    %456 = vmatpush1.msra.mxu0 %v179
    %457 = vmatprep.subr.mxu0 0.0
    %458 = vmatpush1.msra.mxu0 %v180
    %459 = vmatprep.subr.mxu0 0.0
    %460 = vmatpush1.msra.mxu0 %v181
    %461 = vmatprep.subr.mxu0 0.0
    %462 = vmatpush1.msra.mxu0 %v182
    %463 = vmatprep.subr.mxu0 0.0
    %464 = vmatpush1.msra.mxu0 %v183
    %465 = vmatprep.subr.mxu0 0.0
    %466 = vmatpush1.msra.mxu0 %v184
    %467 = vmatprep.subr.mxu0 0.0
    %468 = vmatpush1.msra.mxu0 %v185
    %469 = vmatprep.subr.mxu0 0.0
    %470 = vmatpush1.msra.mxu0 %v186
    %471 = vmatprep.subr.mxu0 0.0
    %472 = vmatpush1.msra.mxu0 %v187
    %473 = vmatprep.subr.mxu0 0.0
    %474 = vmatpush1.msra.mxu0 %v188
    %475 = vmatprep.subr.mxu0 0.0
    %476 = vmatpush1.msra.mxu0 %v189
    %477 = vmatprep.subr.mxu0 0.0
    %478 = vmatpush1.msra.mxu0 %v190
    %479 = vmatprep.subr.mxu0 0.0
    %480 = vmatpush1.msra.mxu0 %v191
    %481 = vmatprep.mubr.f32.mxu0 %v55
    %482 = vmatmul.mubr.f32.gmra.mrb[0].mxu0 %v54
    %v483 = vpop.f32.mrb[0].mxu0
    %v484 = vadd.f32 %v409, %v483
    %v485 = vpop.f32.mrb[0].mxu0
    %486 = vmatprep.mubr.f32.mxu0 %v63
    %487 = vmatmul.mubr.f32.gmra.mrb[0].mxu0 %v62
    %v488 = vpop.f32.mrb[0].mxu0
    %v489 = vadd.f32 %v414, %v488
    %v490 = vpop.f32.mrb[0].mxu0
    %491 = vdwg.mxu0
    %v492 = vadd.f32 %v46, %v484
    %v493 = vadd.f32 %v47, %v489
    %494 = vst [vmem:[#allocation2] sm:$0xff] %v492
    %495 = vst [vmem:[#allocation2 + $0x8] sm:$0xff] %v493
    // Predicated region
    $region22: #{tpu_custom_call.1} parent=1 // pred_check
      %p496 = pneg %p40
    $region23: #{tpu_custom_call.1} parent=1 // pred_check_branch
      %498 = sbr.rel (%p496) target = $region25
    $region24: #{tpu_custom_call.1} parent=1 // pred_region
      %v499 = vld [vmem:[#allocation2] sm:$0xff]
      %v500 = vld [vmem:[#allocation2 + $0x8] sm:$0xff]
      %501 = vst [vmem:[#allocation8] sm:$0xff] %v499
      %502 = vst [vmem:[#allocation8 + $0x8] sm:$0xff] %v500
    $region25: #{tpu_custom_call.1} parent=1 // pred_fallthru
      _
    // Predicated region
    $region26: #{tpu_custom_call.1} parent=1 // pred_check
      _
    $region27: #{tpu_custom_call.1} parent=1 // pred_check_branch
      %504 = sbr.rel (0) target = $region29
    $region28: #{tpu_custom_call.1} parent=1 // pred_region
      %s506 = ssub.s32 256, 256
      %507 = vsyncadd [#allocation5], %s506
      %s508 = sshll.u32 [#allocation8], 4
      %s509 = int_to_ptr.vmem [resolvable:$true] %s508
      %514 = dma.vmem_to_hbm [thread:$0]  %s509, 256, %s2, [#allocation5], 128, 128, 8
    $region29: #{tpu_custom_call.1} parent=1 // pred_fallthru
      _
    // Predicated region
    $region30: #{tpu_custom_call.1} parent=1 // pred_check
      _
    $region31: #{tpu_custom_call.1} parent=1 // pred_check_branch
      %516 = sbr.rel (0) target = $region33
    $region32: #{tpu_custom_call.1} parent=1 // pred_region
      %517 = dma.done [#allocation5], 256
    $region33: #{tpu_custom_call.1} parent=1 // pred_fallthru
      _
    %518 = vsyncpa [#allocation4], 1
    %519 = vsyncpa [#allocation7], 1
    %520 = vsyncpa [#allocation5], 1

</llo_original>
